<compile_context>
chip_gen: v5e
topology: v5e:2x2
jax: 0.10.0
libtpu: 0.0.40
codegen_flags: <defaults>
</compile_context>

<pallas_src>
import jax
import jax.numpy as jnp
from jax.experimental import pallas as pl
from jax.experimental.pallas import tpu as pltpu

_LANES = 128  # lane width: keep the last dim a multiple of 128 -> unmasked vst


def _mulsin_kernel(x_ref, o_ref):
    # Elementwise: out = sin(x) * x, computed in f32 (no-op for f32 inputs).
    x = x_ref[...]
    xf = x.astype(jnp.float32)
    o_ref[...] = (jnp.sin(xf) * xf).astype(o_ref.dtype)


def _round_up(v, m):
    return ((v + m - 1) // m) * m


def _sublane_granule(dtype):
    itemsize = jnp.dtype(dtype).itemsize
    if itemsize == 1:
        return 32
    if itemsize == 2:
        return 16
    return 8


def mulsin_pallas(x, *, tm=4096):
    """Compute sin(x) * x for an arbitrarily shaped array via a Pallas kernel.

    The array is viewed as a lane-dense (rows, 128) slab and processed in
    (tm_eff, 128) row tiles.  `tm` (rows per tile) defaults to 4096
    (~2 MiB/buffer for f32), which sits at the measured HBM-roofline plateau
    on every generation; the real per-chip knobs are the scoped-VMEM default
    (16 MiB v5e / 32 MiB v6e+v7x) and, on v7x, keeping >= 2 grid programs so
    both TensorCores are busy (handled below).
    """
    orig_shape = x.shape
    dtype = x.dtype
    n = x.size
    itemsize = jnp.dtype(dtype).itemsize

    flat = x.reshape(-1)

    # Pad only when n is not lane-aligned (pad < 128 elements); otherwise the
    # wrapper does no extra HBM passes at all.
    pad = (-n) % _LANES
    if pad:
        flat = jnp.pad(flat, (0, pad))
    rows = (n + pad) // _LANES
    x2d = flat.reshape(rows, _LANES)

    # Row-tile selection: dtype-aware sublane rounding + ensure >= 2 grid
    # programs whenever possible (v7x has 2 TensorCores to shard across).
    granule = _sublane_granule(dtype)
    if rows <= granule:
        tm_eff = rows  # single block equal to the full array extent
    else:
        tm_eff = max(granule, (min(tm, rows) // granule) * granule)
        if tm_eff >= rows:  # would collapse to grid=(1,): split for 2 TCs
            tm_eff = max(granule, _round_up(pl.cdiv(rows, 2), granule))
    grid = (pl.cdiv(rows, tm_eff),)

    out2d = pl.pallas_call(
        _mulsin_kernel,
        out_shape=jax.ShapeDtypeStruct((rows, _LANES), dtype),
        grid_spec=pltpu.PrefetchScalarGridSpec(
            num_scalar_prefetch=0,
            grid=grid,
            # TODO(synk): sweep pipeline_mode=pl.Buffered(3) on the input spec
            #             if a profile shows exposed DMA at step starts.
            in_specs=[pl.BlockSpec((tm_eff, _LANES), lambda i: (i, 0))],
            out_specs=pl.BlockSpec((tm_eff, _LANES), lambda i: (i, 0)),
        ),
        compiler_params=pltpu.CompilerParams(
            dimension_semantics=("parallel",),
            vmem_limit_bytes=32 << 20,  # headroom; safe on v5e/v6e/v7x
        ),
        cost_estimate=pl.CostEstimate(
            flops=n,                           # one multiply per element
            transcendentals=n,                 # one sin per element
            bytes_accessed=2 * n * itemsize,   # read x, write out
        ),
    )(x2d)

    if pad:
        return out2d.reshape(-1)[:n].reshape(orig_shape)
    return out2d.reshape(orig_shape)


def mulsin_ref(x):
    return jnp.sin(x) * x


if __name__ == "__main__":
    # Small shape consistent with an elementwise module: (batch=2, channels=4, 16, 16).
    key = jax.random.PRNGKey(0)
    x = jax.random.normal(key, (2, 4, 16, 16), dtype=jnp.float32)

    out = mulsin_pallas(x)
    jax.block_until_ready(out)

    ref = mulsin_ref(x)
    assert out.shape == x.shape and out.dtype == x.dtype
    assert jnp.allclose(out, ref, atol=1e-5, rtol=1e-5), "mismatch vs reference"

    print("KERNEL_OK")
</pallas_src>

<mosaic_0001>
module attributes {stable_mosaic.version = 11 : i64} {
  func.func @_mulsin_kernel(%arg0: i32, %arg1: memref<8x128xf32, #tpu.memory_space<vmem>>, %arg2: memref<8x128xf32, #tpu.memory_space<vmem>>) attributes {dimension_semantics = [#tpu.dimension_semantics<parallel>], iteration_bounds = array<i64: 2>, scalar_prefetch = 0 : i64, scratch_operands = 0 : i64, tpu.core_type = #tpu.core_type<tc>, window_params = [{transform_indices = @transform_0, window_bounds = array<i64: 8, 128>}, {transform_indices = @transform_1, window_bounds = array<i64: 8, 128>}]} {
    %c0 = arith.constant 0 : index
    %c0_0 = arith.constant 0 : index
    %0 = vector.load %arg1[%c0, %c0_0] : memref<8x128xf32, #tpu.memory_space<vmem>>, vector<8x128xf32>
    %1 = math.sin %0 : vector<8x128xf32>
    %2 = arith.mulf %1, %0 : vector<8x128xf32>
    %c0_1 = arith.constant 0 : index
    %c0_2 = arith.constant 0 : index
    %3 = vector.load %arg2[%c0_1, %c0_2] : memref<8x128xf32, #tpu.memory_space<vmem>>, vector<8x128xf32>
    tpu.vector_store %arg2[%c0_1, %c0_2], %2 {strides = array<i32>} : memref<8x128xf32, #tpu.memory_space<vmem>>, vector<8x128xf32>,
    return
  }
  func.func @transform_0(%arg0: i32) -> (i32, i32) {
    %c0_i32 = arith.constant 0 : i32
    %c0_i32_0 = arith.constant 0 : i32
    return %arg0, %c0_i32 : i32, i32
  }
  func.func @transform_1(%arg0: i32) -> (i32, i32) {
    %c0_i32 = arith.constant 0 : i32
    %c0_i32_0 = arith.constant 0 : i32
    return %arg0, %c0_i32 : i32, i32
  }
}

</mosaic_0001>

<llo_original>
// kernel: tpu_custom_call.1
$region0: #{tpu_custom_call.1}
  #allocation0 [shape = 'u32[]', space=smem, size = 0x4, offset = 0x4, fixed_abs, tag = 'smem constant byte address 0x4 - core index']
  #allocation1 [shape = 'u32[72,128]{1,0:T(1,128)}', space=vmem, size = 0x9000, scoped, tag = 'internal scratch']
  %s0 = inlined_call_operand.hbm [shape: f32[16,128], index: 0, kind: input, shape index: {}]
  %s1 = inlined_call_operand.hbm [shape: f32[16,128], index: 1, kind: output, shape index: {}]
  %s2 = sld [smem:[#allocation0]]
  $region41: #{tpu_custom_call.1} parent=0
    _
  %s4 = ssub.s32 1, %s2
  %s5 = scalar_select 0, %s4, %s2
  $region1: #{tpu_custom_call.1} parent=0
    #allocation2 [shape = 'u8[8192]{0}', space=vmem, size = 0x2000, scoped, tag = 'input window, operand 0']
    #allocation3 [shape = 's32[2]{0}', space=sflag, size = 0x8, scoped, tag = 'scoped memory for tpu_custom_call.1']
    #allocation4 [shape = 's32[2]{0}', space=sflag, size = 0x8, scoped, tag = 'scoped memory for tpu_custom_call.1']
    #allocation5 [shape = 'u8[8192]{0}', space=vmem, size = 0x2000, scoped, tag = 'output window, operand 0']
    %6 = vsyncpa [#allocation3], 0
    %s7 = scalar_lea.sflag [#allocation3], 1
    %8 = vsyncpa %s7, 0
    %9 = vsyncpa [#allocation4], 0
    %s10 = scalar_lea.sflag [#allocation4], 1
    %11 = vsyncpa %s10, 0
    loop: start=0, step=1, limit=4
    $region2: #{tpu_custom_call.1} parent=1 // loop_pre_header
      _
    $region3: #{tpu_custom_call.1} parent=1 // loop_header
      %s13 = sphi 0, %s17
      %p14 = scmp.ge.s32.totalorder %s13, 4
      %s23 = sphi 0, %s25
      %s26 = sphi 0, %s23
      %s27 = sphi 0, %s26
      %s43 = sphi 0, %s27
      %s49 = sphi 0, %s51
      %s52 = sphi 0, %s49
      %s53 = sphi 0, %s52
      %s69 = sphi 0, %s53
    $region4: #{tpu_custom_call.1} parent=1 // loop_header_branch
      %16 = sbr.rel (%p14) target = $region8
    $region5: #{tpu_custom_call.1} parent=1 // loop_body
      %s18 = ssub.s32 %s13, 1
      %s19 = ssub.s32 %s13, 2
      %s20 = sadd.s32 %s13, 1
      %s21 = ssub.s32 %s13, %s20
      %p22 = scmp.eq.s32.totalorder %s21, 0
      %s24 = sadd.s32 %s23, 1
      %s25 = scalar_select %p22, %s23, %s24
      %p28 = pneg %p22
      %p29 = scmp.eq.s32.totalorder %s13, 1
      %p30 = por %p28, %p29
      %p31 = scmp.ne.s32.totalorder %s23, %s26
      %p32 = scmp.eq.s32.totalorder %s13, 0
      %p33 = por %p31, %p32
      %p34 = scmp.ne.s32.totalorder %s23, %s26
      %p35 = scmp.eq.s32.totalorder %s18, 1
      %p36 = por %p34, %p35
      %p37 = scmp.ne.s32.totalorder %s26, %s27
      %p38 = scmp.eq.s32.totalorder %s18, 0
      %p39 = por %p37, %p38
      %p40 = scmp.ne.s32.totalorder %s26, %s27
      %p41 = scmp.eq.s32.totalorder %s19, 1
      %p42 = por %p40, %p41
      %p44 = scmp.ne.s32.totalorder %s27, %s43
      %p45 = scmp.eq.s32.totalorder %s19, 0
      %p46 = por %p44, %p45
      %s47 = ssub.s32 %s13, %s20
      %p48 = scmp.eq.s32.totalorder %s47, 0
      %s50 = sadd.s32 %s49, 1
      %s51 = scalar_select %p48, %s49, %s50
      %p54 = pneg %p48
      %p55 = scmp.eq.s32.totalorder %s13, 1
      %p56 = por %p54, %p55
      %p57 = scmp.ne.s32.totalorder %s49, %s52
      %p58 = scmp.eq.s32.totalorder %s13, 0
      %p59 = por %p57, %p58
      %p60 = scmp.ne.s32.totalorder %s49, %s52
      %p61 = scmp.eq.s32.totalorder %s18, 1
      %p62 = por %p60, %p61
      %p63 = scmp.ne.s32.totalorder %s52, %s53
      %p64 = scmp.eq.s32.totalorder %s18, 0
      %p65 = por %p63, %p64
      %p66 = scmp.ne.s32.totalorder %s52, %s53
      %p67 = scmp.eq.s32.totalorder %s19, 1
      %p68 = por %p66, %p67
      %p70 = scmp.ne.s32.totalorder %s53, %s69
      %p71 = scmp.eq.s32.totalorder %s19, 0
      %p72 = por %p70, %p71
      %p73 = scmp.le.s32.totalorder 1, %s13
      %p74 = scmp.lt.s32.totalorder %s13, 3
      %p75 = pnand %p73, %p74
      %p76 = pneg %p75
      // Predicated region
      $region9: #{tpu_custom_call.1} parent=5 // pred_check
        _
      $region10: #{tpu_custom_call.1} parent=5 // pred_check_branch
        %78 = sbr.rel (%p75) target = $region12
      $region11: #{tpu_custom_call.1} parent=5 // pred_region
        %s79 = ssub.s32 %s13, 1
      $region12: #{tpu_custom_call.1} parent=5 // pred_fallthru
        _
      %p80 = scmp.lt.s32.totalorder %s13, 2
      // Predicated region
      $region13: #{tpu_custom_call.1} parent=5 // pred_check
        %p81 = pneg %p80
      $region14: #{tpu_custom_call.1} parent=5 // pred_check_branch
        %83 = sbr.rel (%p81) target = $region16
      $region15: #{tpu_custom_call.1} parent=5 // pred_region
        // Predicated region
        $region17: #{tpu_custom_call.1} parent=15 // pred_check
          %p84 = pneg %p33
        $region18: #{tpu_custom_call.1} parent=15 // pred_check_branch
          %86 = sbr.rel (%p84) target = $region20
        $region19: #{tpu_custom_call.1} parent=15 // pred_region
          %s87 = sand.u32 %s23, 1
          %s88 = scalar_lea.sflag [#allocation3], %s87
          %s89 = sand.u32 %s23, 1
          %s90 = smul.addr %s89, 8
          %s91 = scalar_lea.vmem [#allocation2], %s90
          %93 = vsyncadd %s88, 0
          %s94 = smul.addr %s13, 8
          %s95 = scalar_lea.hbm %s0, %s94
          %s97 = sshll.u32 %s95, 4
          %s98 = int_to_ptr.hbm [resolvable:$true] %s97
          %s99 = sshll.u32 %s91, 4
          %s100 = int_to_ptr.vmem [resolvable:$true] %s99
          %102 = dma.hbm_to_vmem [thread:$0]  %s98, 128, %s100, %s88
        $region20: #{tpu_custom_call.1} parent=15 // pred_fallthru
          _
      $region16: #{tpu_custom_call.1} parent=5 // pred_fallthru
        _
      %p103 = scmp.le.s32.totalorder 1, %s13
      %p104 = scmp.lt.s32.totalorder %s13, 3
      %p105 = pnand %p103, %p104
      %p106 = pneg %p105
      // Predicated region
      $region21: #{tpu_custom_call.1} parent=5 // pred_check
        _
      $region22: #{tpu_custom_call.1} parent=5 // pred_check_branch
        %108 = sbr.rel (%p105) target = $region24
      $region23: #{tpu_custom_call.1} parent=5 // pred_region
        %s109 = ssub.s32 %s13, 1
        %s110 = sand.u32 %s26, 1
        %s111 = scalar_lea.sflag [#allocation3], %s110
        %s112 = sand.u32 %s26, 1
        %s113 = smul.addr %s112, 8
        %s114 = scalar_lea.vmem [#allocation2], %s113
        // Predicated region
        $region25: #{tpu_custom_call.1} parent=23 // pred_check
          %p115 = pneg %p39
        $region26: #{tpu_custom_call.1} parent=23 // pred_check_branch
          %117 = sbr.rel (%p115) target = $region28
        $region27: #{tpu_custom_call.1} parent=23 // pred_region
          %119 = dma.done %s111, 128
        $region28: #{tpu_custom_call.1} parent=23 // pred_fallthru
          _
        %s120 = sand.u32 %s26, 1
        %s121 = scalar_lea.sflag [#allocation3], %s120
        %s122 = sand.u32 %s26, 1
        %s123 = smul.addr %s122, 8
        %s124 = scalar_lea.vmem [#allocation2], %s123
        %p125 = pneg %p39
        %p126 = pneg %p36
        %p127 = pneg %p65
        %p128 = pneg %p62
        %s129 = sand.u32 %s52, 1
        %s130 = scalar_lea.sflag [#allocation4], %s129
        %s131 = sand.u32 %s52, 1
        %s132 = smul.addr %s131, 8
        %s133 = scalar_lea.vmem [#allocation5], %s132
        %v134 = vld [vmem:[%s114] sm:$0xff]
        %v135 = vand.u32 2147483647, %v134
        %vm136 = vcmp.le.f32.partialorder %v135, 0.7853982
        %vm137 = vcmp.lt.s32.totalorder %v134, 0
        %v138 = vand.u32 %v134, 2139095040
        %v139 = vshrl.u32 %v138, 23
        %v140 = vsub.s32 %v139, 127
        %v141 = vand.u32 2147483647, %v134
        %v142 = vand.u32 %v141, 8388607
        %v143 = vor.u32 %v142, 8388608
        %v144 = vsub.s32 0, %v143
        %v145 = vadd.s32 %v140, 1
        %vm146 = vcmp.gt.s32.totalorder %v145, 0
        %v147 = vsel %vm146, %v145, 0
        %v148 = vshrl.u32 %v147, 5
        %v149 = vand.u32 %v147, 31
        %v150 = vsub.s32 32, %v149
        %v151 = vshrl.u32 683565275, %v150
        %v152 = vshll.u32 683565275, %v149
        %v153 = vshrl.u32 2475754826, %v150
        %v154 = vor.u32 %v152, %v153
        %v155 = vshll.u32 2475754826, %v149
        %v156 = vshrl.u32 2131351028, %v150
        %v157 = vor.u32 %v155, %v156
        %v158 = vshll.u32 2131351028, %v149
        %v159 = vshrl.u32 2102212464, %v150
        %v160 = vor.u32 %v158, %v159
        %v161 = vshll.u32 2102212464, %v149
        %v162 = vshrl.u32 920167782, %v150
        %v163 = vor.u32 %v161, %v162
        %v164 = vshll.u32 920167782, %v149
        %v165 = vshrl.u32 1326507024, %v150
        %v166 = vor.u32 %v164, %v165
        %vm167 = vcmp.lt.s32.totalorder %v148, 1
        %vm168 = vcmp.lt.s32.totalorder %v148, 2
        %vm169 = vcmp.lt.s32.totalorder %v148, 3
        %vm170 = vcmp.lt.s32.totalorder %v148, 4
        %v171 = vsel %vm167, %v151, %v154
        %v172 = vsel %vm170, %v160, 2102212464
        %v173 = vsel %vm169, %v157, %v172
        %v174 = vsel %vm168, %v171, %v173
        %v175 = vsel %vm167, %v154, %v157
        %v176 = vsel %vm170, %v163, 920167782
        %v177 = vsel %vm169, %v160, %v176
        %v178 = vsel %vm168, %v175, %v177
        %v179 = vsel %vm167, %v157, %v160
        %v180 = vsel %vm170, %v166, 1326507024
        %v181 = vsel %vm169, %v163, %v180
        %v182 = vsel %vm168, %v179, %v181
        %v183 = vshll.u32 %v143, 8
        %v184 = vand.u32 %v183, 65535
        %v185 = vshrl.u32 %v183, 16
        %v186 = vand.u32 %v182, 65535
        %v187 = vshrl.u32 %v182, 16
        %v188 = vmul.u32 %v184, %v186
        %v189 = vmul.u32 %v184, %v187
        %v190 = vmul.u32 %v185, %v186
        %v191 = vmul.u32 %v185, %v187
        %v192 = vshll.u32 %v189, 16
        %v193 = vshrl.u32 %v189, 16
        %v194 = vshll.u32 %v190, 16
        %v195 = vshrl.u32 %v190, 16
        %vm196 = vc.u32 %v188, %v192
        %v197 = vsel %vm196, 1, 0
        %v198 = vadd.s32 %v188, %v192
        %v199 = vadd.s32 %v191, %v197
        %vm200 = vc.u32 %v198, %v194
        %v201 = vsel %vm200, 1, 0
        %v202 = vadd.s32 %v198, %v194
        %v203 = vadd.s32 %v199, %v201
        %v204 = vadd.s32 %v203, %v193
        %v205 = vadd.s32 %v204, %v195
        %v206 = vand.u32 %v183, 65535
        %v207 = vshrl.u32 %v183, 16
        %v208 = vand.u32 %v178, 65535
        %v209 = vshrl.u32 %v178, 16
        %v210 = vmul.u32 %v206, %v208
        %v211 = vmul.u32 %v206, %v209
        %v212 = vmul.u32 %v207, %v208
        %v213 = vmul.u32 %v207, %v209
        %v214 = vshll.u32 %v211, 16
        %v215 = vshrl.u32 %v211, 16
        %v216 = vshll.u32 %v212, 16
        %v217 = vshrl.u32 %v212, 16
        %vm218 = vc.u32 %v210, %v214
        %v219 = vsel %vm218, 1, 0
        %v220 = vadd.s32 %v210, %v214
        %v221 = vadd.s32 %v213, %v219
        %vm222 = vc.u32 %v220, %v216
        %v223 = vsel %vm222, 1, 0
        %v224 = vadd.s32 %v220, %v216
        %v225 = vadd.s32 %v221, %v223
        %v226 = vadd.s32 %v225, %v215
        %v227 = vadd.s32 %v226, %v217
        %v228 = vmul.u32 %v183, %v174
        %v229 = vadd.s32 %v205, %v224
        %vm230 = vc.u32 %v205, %v224
        %v231 = vadd.s32 %v227, 1
        %v232 = vsel %vm230, %v231, %v227
        %v233 = vadd.s32 %v228, %v232
        %v234 = vadd.s32 %v233, 536870912
        %v235 = vshrl.u32 %v234, 30
        %v236 = vshll.u32 %v235, 30
        %v237 = vsub.s32 %v233, %v236
        %vm238 = vcmp.lt.s32.totalorder %v237, 0
        %v239 = vsub.s32 0, %v237
        %v240 = vsel %vm238, %v239, %v237
        %v241 = vclz %v240
        %v242 = vsub.s32 %v241, 2
        %vm243 = vcmp.gt.s32.totalorder 0, %v242
        %v244 = vsel %vm243, 0, %v242
        %v245 = vsub.s32 32, %v244
        %v246 = vshll.u32 %v237, %v244
        %v247 = vshrl.u32 %v229, %v245
        %v248 = vor.u32 %v246, %v247
        %v249 = vsub.s32 4294967266, %v244
        %v250 = vadd.s32 %v249, 127
        %v251 = vshll.u32 %v250, 23
        %v252 = vor.u32 4788187, %v251
        %v253 = vand.u32 2147483647, %v252
        %v255 = vcvt.s32.f32 %v248
        %v256 = vmul.f32 %v255, %v253
        %v257 = vxor.u32 %v256, 2147483648
        %v258 = vsel %vm137, %v257, %v256
        %v259 = vsub.s32 4, %v235
        %v260 = vsel %vm137, %v259, %v235
        %v261 = vsel %vm136, %v134, %v258
        %v262 = vsel %vm136, 0, %v260
        %v263 = vmul.f32 %v261, %v261
        %v264 = vmul.f32 %v263, -0.001358992
        %v265 = vadd.f32 %v264, 0.041655596
        %v266 = vmul.f32 %v263, %v265
        %v267 = vadd.f32 %v266, -0.4999988
        %v268 = vmul.f32 %v263, %v267
        %v269 = vadd.f32 1.0, %v268
        %v270 = vmul.f32 %v261, %v261
        %v271 = vmul.f32 %v270, -0.00019511016
        %v272 = vadd.f32 %v271, 0.008332121
        %v273 = vmul.f32 %v270, %v272
        %v274 = vadd.f32 %v273, -0.16666654
        %v275 = vmul.f32 %v270, %v274
        %v276 = vadd.f32 %v275, 1.0
        %v277 = vmul.f32 %v276, %v261
        %vm278 = vweird.f32 %v134
        %v279 = vadd.s32 %v262, 3
        %v280 = vand.u32 %v279, 3
        %vm281 = vcmp.lt.s32.totalorder %v280, 2
        %vm282 = vcmp.eq.s32.totalorder %v280, 0
        %v283 = vxor.u32 %v277, 2147483648
        %v284 = vsel %vm282, %v269, %v283
        %vm285 = vcmp.eq.s32.totalorder %v280, 2
        %v286 = vxor.u32 %v269, 2147483648
        %v287 = vsel %vm285, %v286, %v277
        %v288 = vsel %vm281, %v284, %v287
        %v289 = vsel %vm278, nan, %v288
        %v290 = vmul.f32 %v289, %v134
        %291 = vst [vmem:[%s133] sm:$0xff] %v290
        %s292 = sand.u32 %s52, 1
        %s293 = scalar_lea.sflag [#allocation4], %s292
        %s294 = sand.u32 %s52, 1
        %s295 = smul.addr %s294, 8
        %s296 = scalar_lea.vmem [#allocation5], %s295
        // Predicated region
        $region29: #{tpu_custom_call.1} parent=23 // pred_check
          %p297 = pneg %p62
        $region30: #{tpu_custom_call.1} parent=23 // pred_check_branch
          %299 = sbr.rel (%p297) target = $region32
        $region31: #{tpu_custom_call.1} parent=23 // pred_region
          %301 = vsyncadd %s293, 0
          %s302 = smul.addr %s18, 8
          %s303 = scalar_lea.hbm %s1, %s302
          %s305 = sshll.u32 %s296, 4
          %s306 = int_to_ptr.vmem [resolvable:$true] %s305
          %s307 = sshll.u32 %s303, 4
          %s308 = int_to_ptr.hbm [resolvable:$true] %s307
          %310 = dma.vmem_to_hbm [thread:$0]  %s306, 128, %s308, %s293
        $region32: #{tpu_custom_call.1} parent=23 // pred_fallthru
          _
      $region24: #{tpu_custom_call.1} parent=5 // pred_fallthru
        _
      %p311 = scmp.le.s32.totalorder 2, %s13
      // Predicated region
      $region33: #{tpu_custom_call.1} parent=5 // pred_check
        %p312 = pneg %p311
      $region34: #{tpu_custom_call.1} parent=5 // pred_check_branch
        %314 = sbr.rel (%p312) target = $region36
      $region35: #{tpu_custom_call.1} parent=5 // pred_region
        %s315 = ssub.s32 %s13, 2
        // Predicated region
        $region37: #{tpu_custom_call.1} parent=35 // pred_check
          %p316 = pneg %p68
        $region38: #{tpu_custom_call.1} parent=35 // pred_check_branch
          %318 = sbr.rel (%p316) target = $region40
        $region39: #{tpu_custom_call.1} parent=35 // pred_region
          %s319 = sand.u32 %s53, 1
          %s320 = scalar_lea.sflag [#allocation4], %s319
          %s321 = sand.u32 %s53, 1
          %s322 = smul.addr %s321, 8
          %s323 = scalar_lea.vmem [#allocation5], %s322
          %325 = dma.done %s320, 128
        $region40: #{tpu_custom_call.1} parent=35 // pred_fallthru
          _
      $region36: #{tpu_custom_call.1} parent=5 // pred_fallthru
        _
    $region6: #{tpu_custom_call.1} parent=1 // loop_footer
      %s17 = sadd.s32 1, %s13
    $region7: #{tpu_custom_call.1} parent=1 // loop_footer_branch
      %12 = sbr.rel target = $region3
    $region8: #{tpu_custom_call.1} parent=1 // loop_exit
      _
    %326 = vsyncpa [#allocation3], 1
    %s327 = scalar_lea.sflag [#allocation3], 1
    %328 = vsyncpa %s327, 1
    %329 = vsyncpa [#allocation4], 1
    %s330 = scalar_lea.sflag [#allocation4], 1
    %331 = vsyncpa %s330, 1

</llo_original>
